<compile_context>
chip_gen: v6e
topology: v6e:2x2x1
jax: 0.10.0
libtpu: 0.0.40
codegen_flags: <defaults>
</compile_context>

<pallas_src>
import functools

import jax
import jax.numpy as jnp
from jax import lax
from jax.experimental import pallas as pl
from jax.experimental.pallas import tpu as pltpu


def _quantile_loss_kernel(true_ref, pred_ref, out_ref, *,
                          quantiles, n_rows, n_true_cols, tile_b, tile_t,
                          mask_rows, mask_lanes):
    """Per-tile pinball-loss partial sums.

    true_ref: [tile_b, tile_t]      (rows of `true`)
    pred_ref: [tile_b, tile_t * Q]  (same rows of `pred`, native q-minor layout)
    out_ref : [1, 1, tile_t * Q]    per-row-tile partial sums (resident across j)
    """
    Q = len(quantiles)
    tile_l = tile_t * Q
    i = pl.program_id(0)   # row-tile index   ("parallel")
    j = pl.program_id(1)   # lane-tile index  ("arbitrary": accumulation axis)

    @pl.when(j == 0)
    def _init():
        out_ref[...] = jnp.zeros_like(out_ref)

    true_t = true_ref[...].astype(jnp.float32)   # [tile_b, tile_t]
    pred_t = pred_ref[...].astype(jnp.float32)   # [tile_b, tile_l]

    # Zero garbage lanes of the edge `true` tile so stale NaN/Inf cannot reach
    # valid lanes through 0 * NaN in the expansion matmul below.
    if mask_lanes:
        t_ids = j * tile_t + lax.broadcasted_iota(jnp.int32, (1, tile_t), 1)
        true_t = jnp.where(t_ids < n_true_cols, true_t, 0.0)

    # ---- expand true along lanes by Q: true_exp[r, t*Q + k] = true_t[r, t] ----
    # 0/1 matmul on the otherwise-idle MXU; 3 bf16 terms keep it f32-exact.
    rows_e = lax.broadcasted_iota(jnp.int32, (tile_t, tile_l), 0) * Q
    cols_e = lax.broadcasted_iota(jnp.int32, (tile_t, tile_l), 1)
    expand = ((cols_e >= rows_e) & (cols_e < rows_e + Q)).astype(jnp.bfloat16)

    true_exp = jnp.zeros((tile_b, tile_l), jnp.float32)
    resid = true_t
    for _ in range(3):                  # 3 bf16 terms cover the f32 mantissa
        term = resid.astype(jnp.bfloat16)
        true_exp = true_exp + jnp.dot(term, expand,
                                      preferred_element_type=jnp.float32)
        resid = resid - term.astype(jnp.float32)

    # ---- pinball loss, algebraic form: 0.5*|e| + (q - 0.5)*e ----
    err = true_exp - pred_t                                       # [tile_b, tile_l]
    phase = lax.broadcasted_iota(jnp.int32, (1, tile_l), 1) % Q   # lane -> quantile
    coef = jnp.zeros((1, tile_l), jnp.float32)
    for k, q in enumerate(quantiles):
        coef = jnp.where(phase == k, jnp.float32(q - 0.5), coef)
    loss = 0.5 * jnp.abs(err) + coef * err

    # Edge-tile masking (emitted only when the shapes actually need it).
    valid = None
    if mask_rows:
        r_ids = i * tile_b + lax.broadcasted_iota(jnp.int32, (tile_b, 1), 0)
        valid = r_ids < n_rows
    if mask_lanes:
        l_ids = j * tile_l + lax.broadcasted_iota(jnp.int32, (1, tile_l), 1)
        lane_ok = l_ids < n_true_cols * Q
        valid = lane_ok if valid is None else (valid & lane_ok)
    if valid is not None:
        loss = jnp.where(valid, loss, 0.0)

    # Sublane-only partial reduce; lanes stay dense.  Final tiny reduce in XLA.
    out_ref[...] += jnp.sum(loss, axis=0, keepdims=True)[None]


def quantile_loss(true, pred, quantiles, *, tile_rows=1024):
    """true: [B, T], pred: [B, T, Q] -> scalar mean quantile (pinball) loss."""
    B, T = true.shape
    Q = pred.shape[-1]
    assert Q == len(quantiles)

    # Free view of the native layout: collapse (T, Q) -> T*Q.  No transpose.
    pred2 = pred.reshape(B, T * Q)

    # Lane tile: multiple of both Q and 128 (keeps pred blocks lane-dense and
    # the true<->pred phase alignment static); full dim when T*Q is small.
    # tile_t stays at 128 so the expansion matmul always hides under the DMA.
    lane_tile = Q * 128
    tile_l = lane_tile if T * Q >= lane_tile else T * Q
    tile_t = tile_l // Q

    tile_rows = max(8, (int(tile_rows) // 8) * 8)   # keep sublane-aligned
    tile_b = B if B <= tile_rows else tile_rows
    grid_b = pl.cdiv(B, tile_b)
    # Megacore: if all rows landed in a single tile but B is large, split it so
    # the "parallel" axis has work for both TensorCores (v7x).
    if grid_b == 1 and B >= 512:
        tile_b = pl.cdiv(pl.cdiv(B, 2), 8) * 8
        grid_b = pl.cdiv(B, tile_b)
    grid_j = pl.cdiv(T * Q, tile_l)

    kernel = functools.partial(
        _quantile_loss_kernel,
        quantiles=tuple(float(q) for q in quantiles),
        n_rows=B,
        n_true_cols=T,
        tile_b=tile_b,
        tile_t=tile_t,
        mask_rows=(B % tile_b) != 0,
        mask_lanes=(T % tile_t) != 0,
    )

    n_elems = B * T * Q
    mm_flops = 6 * grid_b * grid_j * tile_b * tile_t * tile_l
    partials = pl.pallas_call(
        kernel,
        out_shape=jax.ShapeDtypeStruct((grid_b, 1, tile_l), jnp.float32),
        grid_spec=pltpu.PrefetchScalarGridSpec(
            num_scalar_prefetch=0,
            grid=(grid_b, grid_j),
            in_specs=[
                pl.BlockSpec((tile_b, tile_t), lambda i, j: (i, j)),  # true
                pl.BlockSpec((tile_b, tile_l), lambda i, j: (i, j)),  # pred (native)
            ],
            out_specs=pl.BlockSpec((1, 1, tile_l), lambda i, j: (i, 0, 0)),
        ),
        compiler_params=pltpu.CompilerParams(
            dimension_semantics=("parallel", "arbitrary"),
            vmem_limit_bytes=32 * 1024 * 1024,
        ),
        cost_estimate=pl.CostEstimate(
            flops=8 * n_elems + mm_flops,
            transcendentals=0,
            bytes_accessed=(Q + 1) * B * T * 4 + grid_b * tile_l * 4,
        ),
    )(true, pred2)

    return jnp.sum(partials) / jnp.float32(n_elems)


def quantile_loss_ref(true, pred, quantiles):
    """Plain-JAX reference matching the PyTorch forward exactly."""
    losses = []
    for i, q in enumerate(quantiles):
        err = true - pred[:, :, i]
        losses.append(jnp.maximum(q * err, (q - 1.0) * err))
    return jnp.mean(jnp.stack(losses, axis=-1))


if __name__ == "__main__":
    quantiles = [0.1, 0.5, 0.9]

    # --- small demo shapes consistent with the module (single tile) ---
    B, T = 2, 16
    key = jax.random.PRNGKey(0)
    k1, k2, k3, k4 = jax.random.split(key, 4)
    true = jax.random.normal(k1, (B, T), dtype=jnp.float32)
    pred = jax.random.normal(k2, (B, T, len(quantiles)), dtype=jnp.float32)

    loss = jax.jit(lambda t, p: quantile_loss(t, p, quantiles))(true, pred)
    loss = jax.block_until_ready(loss)
    ref = quantile_loss_ref(true, pred, quantiles)
    assert jnp.allclose(loss, ref, rtol=1e-5, atol=1e-6), (loss, ref)

    # --- exercise the gridded / edge-masked path (multiple row & lane tiles) ---
    B2, T2 = 20, 160  # T2*Q = 480 -> 2 lane tiles; tile_rows=8 -> 3 row tiles
    true2 = jax.random.normal(k3, (B2, T2), dtype=jnp.float32)
    pred2 = jax.random.normal(k4, (B2, T2, len(quantiles)), dtype=jnp.float32)

    loss2 = jax.jit(lambda t, p: quantile_loss(t, p, quantiles, tile_rows=8))(true2, pred2)
    loss2 = jax.block_until_ready(loss2)
    ref2 = quantile_loss_ref(true2, pred2, quantiles)
    assert jnp.allclose(loss2, ref2, rtol=1e-5, atol=1e-6), (loss2, ref2)

    print("KERNEL_OK")
</pallas_src>

<mosaic_0001>
module attributes {stable_mosaic.version = 11 : i64} {
  func.func @_quantile_loss_kernel(%arg0: i32, %arg1: i32, %arg2: memref<2x16xf32, #tpu.memory_space<vmem>>, %arg3: memref<2x48xf32, #tpu.memory_space<vmem>>, %arg4: memref<1x1x48xf32, #tpu.memory_space<vmem>>) attributes {dimension_semantics = [#tpu.dimension_semantics<parallel>, #tpu.dimension_semantics<arbitrary>], iteration_bounds = array<i64: 1, 1>, scalar_prefetch = 0 : i64, scratch_operands = 0 : i64, tpu.core_type = #tpu.core_type<tc>, window_params = [{transform_indices = @transform_0, window_bounds = array<i64: 2, 16>}, {transform_indices = @transform_1, window_bounds = array<i64: 2, 48>}, {transform_indices = @transform_2, window_bounds = array<i64: 1, 1, 48>}]} {
    %c0_i32 = arith.constant 0 : i32
    %0 = arith.cmpi eq, %arg1, %c0_i32 : i32
    %1 = arith.extui %0 : i1 to i32
    %c0_i32_0 = arith.constant 0 : i32
    %2 = arith.cmpi ne, %1, %c0_i32_0 : i32
    scf.if %2 {
      %cst_27 = arith.constant 0.000000e+00 : f32
      %74 = vector.broadcast %cst_27 : f32 to vector<1x1x48xf32>
      %c0_28 = arith.constant 0 : index
      %c0_29 = arith.constant 0 : index
      %c0_30 = arith.constant 0 : index
      %75 = vector.load %arg4[%c0_28, %c0_29, %c0_30] : memref<1x1x48xf32, #tpu.memory_space<vmem>>, vector<1x1x48xf32>
      tpu.vector_store %arg4[%c0_28, %c0_29, %c0_30], %74 {strides = array<i32>} : memref<1x1x48xf32, #tpu.memory_space<vmem>>, vector<1x1x48xf32>,
    } else {
    }
    %c0 = arith.constant 0 : index
    %c0_1 = arith.constant 0 : index
    %3 = vector.load %arg2[%c0, %c0_1] : memref<2x16xf32, #tpu.memory_space<vmem>>, vector<2x16xf32>
    %c0_2 = arith.constant 0 : index
    %c0_3 = arith.constant 0 : index
    %4 = vector.load %arg3[%c0_2, %c0_3] : memref<2x48xf32, #tpu.memory_space<vmem>>, vector<2x48xf32>
    %5 = tpu.iota {dimensions = array<i32: 0>} : vector<16x48xi32>
    %c3_i32 = arith.constant 3 : i32
    %6 = vector.broadcast %c3_i32 : i32 to vector<16x48xi32>
    %7 = arith.muli %5, %6 : vector<16x48xi32>
    %8 = tpu.iota {dimensions = array<i32: 1>} : vector<16x48xi32>
    %9 = arith.cmpi sge, %8, %7 : vector<16x48xi32>
    %c3_i32_4 = arith.constant 3 : i32
    %10 = vector.broadcast %c3_i32_4 : i32 to vector<16x48xi32>
    %11 = arith.addi %7, %10 : vector<16x48xi32>
    %12 = arith.cmpi slt, %8, %11 : vector<16x48xi32>
    %13 = arith.andi %9, %12 : vector<16x48xi1>
    %14 = arith.extui %13 : vector<16x48xi1> to vector<16x48xi32>
    %15 = arith.sitofp %14 : vector<16x48xi32> to vector<16x48xf32>
    %16 = arith.truncf %15 : vector<16x48xf32> to vector<16x48xbf16>
    %cst = arith.constant 0.000000e+00 : f32
    %17 = vector.broadcast %cst : f32 to vector<2x48xf32>
    %18 = arith.truncf %3 : vector<2x16xf32> to vector<2x16xbf16>
    %cst_5 = arith.constant dense<0.000000e+00> : vector<2x48xf32>
    %19 = tpu.matmul %18, %16, %cst_5 {dimension_numbers = #tpu.dot_dimension_numbers<[1], [0], [0], [1], [0, 0, 1, 1], [], []>} : vector<2x16xbf16>, vector<16x48xbf16>, vector<2x48xf32> -> vector<2x48xf32>
    %20 = arith.addf %17, %19 : vector<2x48xf32>
    %21 = arith.extf %18 : vector<2x16xbf16> to vector<2x16xf32>
    %22 = arith.subf %3, %21 : vector<2x16xf32>
    %23 = arith.truncf %22 : vector<2x16xf32> to vector<2x16xbf16>
    %cst_6 = arith.constant dense<0.000000e+00> : vector<2x48xf32>
    %24 = tpu.matmul %23, %16, %cst_6 {dimension_numbers = #tpu.dot_dimension_numbers<[1], [0], [0], [1], [0, 0, 1, 1], [], []>} : vector<2x16xbf16>, vector<16x48xbf16>, vector<2x48xf32> -> vector<2x48xf32>
    %25 = arith.addf %20, %24 : vector<2x48xf32>
    %26 = arith.extf %23 : vector<2x16xbf16> to vector<2x16xf32>
    %27 = arith.subf %22, %26 : vector<2x16xf32>
    %28 = arith.truncf %27 : vector<2x16xf32> to vector<2x16xbf16>
    %cst_7 = arith.constant dense<0.000000e+00> : vector<2x48xf32>
    %29 = tpu.matmul %28, %16, %cst_7 {dimension_numbers = #tpu.dot_dimension_numbers<[1], [0], [0], [1], [0, 0, 1, 1], [], []>} : vector<2x16xbf16>, vector<16x48xbf16>, vector<2x48xf32> -> vector<2x48xf32>
    %30 = arith.addf %25, %29 : vector<2x48xf32>
    %31 = arith.subf %30, %4 : vector<2x48xf32>
    %32 = tpu.iota {dimensions = array<i32: 1>} : vector<1x48xi32>
    %c3_i32_8 = arith.constant 3 : i32
    %c0_i32_9 = arith.constant 0 : i32
    %33 = arith.cmpi eq, %c3_i32_8, %c0_i32_9 : i32
    %c1_i32 = arith.constant 1 : i32
    %34 = arith.select %33, %c1_i32, %c3_i32_8 : i32
    %35 = vector.broadcast %34 : i32 to vector<1x48xi32>
    %36 = arith.remsi %32, %35 : vector<1x48xi32>
    %c0_i32_10 = arith.constant 0 : i32
    %37 = vector.broadcast %c0_i32_10 : i32 to vector<1x48xi32>
    %38 = arith.cmpi ne, %36, %37 : vector<1x48xi32>
    %c0_i32_11 = arith.constant 0 : i32
    %39 = vector.broadcast %c0_i32_11 : i32 to vector<1x48xi32>
    %40 = arith.cmpi slt, %36, %39 : vector<1x48xi32>
    %c0_i32_12 = arith.constant 0 : i32
    %41 = arith.cmpi slt, %34, %c0_i32_12 : i32
    %42 = vector.broadcast %41 : i1 to vector<1x48xi1>
    %43 = vector.broadcast %42 : vector<1x48xi1> to vector<1x48xi1>
    %44 = arith.xori %40, %43 : vector<1x48xi1>
    %45 = arith.andi %44, %38 : vector<1x48xi1>
    %46 = vector.broadcast %34 : i32 to vector<1x48xi32>
    %47 = arith.addi %36, %46 : vector<1x48xi32>
    %48 = arith.select %45, %47, %36 : vector<1x48xi1>, vector<1x48xi32>
    %cst_13 = arith.constant 0.000000e+00 : f32
    %49 = vector.broadcast %cst_13 : f32 to vector<1x48xf32>
    %c0_i32_14 = arith.constant 0 : i32
    %50 = vector.broadcast %c0_i32_14 : i32 to vector<1x48xi32>
    %51 = arith.cmpi eq, %48, %50 : vector<1x48xi32>
    %cst_15 = arith.constant -4.000000e-01 : f32
    %52 = vector.broadcast %cst_15 : f32 to vector<1x48xf32>
    %53 = arith.select %51, %52, %49 : vector<1x48xi1>, vector<1x48xf32>
    %c1_i32_16 = arith.constant 1 : i32
    %54 = vector.broadcast %c1_i32_16 : i32 to vector<1x48xi32>
    %55 = arith.cmpi eq, %48, %54 : vector<1x48xi32>
    %cst_17 = arith.constant 0.000000e+00 : f32
    %56 = vector.broadcast %cst_17 : f32 to vector<1x48xf32>
    %57 = arith.select %55, %56, %53 : vector<1x48xi1>, vector<1x48xf32>
    %c2_i32 = arith.constant 2 : i32
    %58 = vector.broadcast %c2_i32 : i32 to vector<1x48xi32>
    %59 = arith.cmpi eq, %48, %58 : vector<1x48xi32>
    %cst_18 = arith.constant 4.000000e-01 : f32
    %60 = vector.broadcast %cst_18 : f32 to vector<1x48xf32>
    %61 = arith.select %59, %60, %57 : vector<1x48xi1>, vector<1x48xf32>
    %62 = math.absf %31 : vector<2x48xf32>
    %cst_19 = arith.constant 5.000000e-01 : f32
    %63 = vector.broadcast %cst_19 : f32 to vector<2x48xf32>
    %64 = arith.mulf %63, %62 : vector<2x48xf32>
    %65 = vector.broadcast %61 : vector<1x48xf32> to vector<2x48xf32>
    %66 = arith.mulf %65, %31 : vector<2x48xf32>
    %67 = arith.addf %64, %66 : vector<2x48xf32>
    %c0_20 = arith.constant 0 : index
    %c0_21 = arith.constant 0 : index
    %c0_22 = arith.constant 0 : index
    %68 = vector.load %arg4[%c0_20, %c0_21, %c0_22] : memref<1x1x48xf32, #tpu.memory_space<vmem>>, vector<1x1x48xf32>
    %cst_23 = arith.constant dense<0.000000e+00> : vector<48xf32>
    %69 = vector.multi_reduction <add>, %67, %cst_23 [0] : vector<2x48xf32> to vector<48xf32>
    %70 = vector.shape_cast %69 : vector<48xf32> to vector<1x48xf32>
    %71 = vector.shape_cast %70 : vector<1x48xf32> to vector<1x1x48xf32>
    %72 = arith.addf %68, %71 : vector<1x1x48xf32>
    %c0_24 = arith.constant 0 : index
    %c0_25 = arith.constant 0 : index
    %c0_26 = arith.constant 0 : index
    %73 = vector.load %arg4[%c0_24, %c0_25, %c0_26] : memref<1x1x48xf32, #tpu.memory_space<vmem>>, vector<1x1x48xf32>
    tpu.vector_store %arg4[%c0_24, %c0_25, %c0_26], %72 {strides = array<i32>} : memref<1x1x48xf32, #tpu.memory_space<vmem>>, vector<1x1x48xf32>,
    return
  }
  func.func @transform_0(%arg0: i32, %arg1: i32) -> (i32, i32) {
    %c0_i32 = arith.constant 0 : i32
    return %arg0, %arg1 : i32, i32
  }
  func.func @transform_1(%arg0: i32, %arg1: i32) -> (i32, i32) {
    %c0_i32 = arith.constant 0 : i32
    return %arg0, %arg1 : i32, i32
  }
  func.func @transform_2(%arg0: i32, %arg1: i32) -> (i32, i32, i32) {
    %c0_i32 = arith.constant 0 : i32
    %c0_i32_0 = arith.constant 0 : i32
    %c0_i32_1 = arith.constant 0 : i32
    return %arg0, %c0_i32, %c0_i32_0 : i32, i32, i32
  }
}

</mosaic_0001>

<llo_original>
// kernel: _lambda_.1
$region0: #{_lambda_.1}
  #allocation0 [shape = 'u32[]', space=smem, size = 0x4, offset = 0x4, fixed_abs, tag = 'smem constant byte address 0x4 - core index']
  #allocation1 [shape = 'u32[144,128]{1,0:T(1,128)}', space=vmem, size = 0x12000, scoped, tag = 'internal scratch']
  %s0 = inlined_call_operand.vmem [shape: f32[2,16], index: 0, kind: input, shape index: {}]
  %s1 = inlined_call_operand.vmem [shape: f32[2,48], index: 1, kind: input, shape index: {}]
  %s2 = inlined_call_operand.vmem [shape: f32[1,1,48], index: 2, kind: output, shape index: {}]
  %s3 = sld [smem:[#allocation0]]
  $region22: #{_lambda_.1} parent=0
    _
  %s5 = ssub.s32 1, %s3
  %s6 = scalar_select 0, %s5, %s3
  // Predicated region
  $region2: #{_lambda_.1} parent=0 // pred_check
    _
  $region3: #{_lambda_.1} parent=0 // pred_check_branch
    %8 = sbr.rel (0) target = $region5
  $region4: #{_lambda_.1} parent=0 // pred_region
    _
  $region5: #{_lambda_.1} parent=0 // pred_fallthru
    _
  // Predicated region
  $region6: #{_lambda_.1} parent=0 // pred_check
    _
  $region7: #{_lambda_.1} parent=0 // pred_check_branch
    %10 = sbr.rel (0) target = $region9
  $region8: #{_lambda_.1} parent=0 // pred_region
    _
  $region9: #{_lambda_.1} parent=0 // pred_fallthru
    _
  %p12 = scmp.eq.s32.totalorder 0, 0
  // Predicated region
  $region10: #{_lambda_.1} parent=0 // pred_check
    %p13 = pneg %p12
  $region11: #{_lambda_.1} parent=0 // pred_check_branch
    %15 = sbr.rel (%p13) target = $region13
  $region12: #{_lambda_.1} parent=0 // pred_region
    %vm16 = vcmask 385024
    %17 = vst.msk [vmem:[%s2] sm:$0x1] %vm16, 0.0
  $region13: #{_lambda_.1} parent=0 // pred_fallthru
    _
  %v18 = vld [vmem:[%s0] sm:$0x3]
  %v19 = vld [vmem:[%s1] sm:$0x3]
  %v20 = vlaneseq
  %v21 = vshrl.u32 %v20, 7
  %v22 = vadd.s32 %v21, 8
  %v23 = vmul.u32 %v21, 3
  %v24 = vmul.u32 %v22, 3
  %v25 = vlaneseq
  %v26 = vand.u32 %v25, 127
  %vm27 = vcmp.ge.s32.totalorder %v26, %v23
  %vm28 = vcmp.ge.s32.totalorder %v26, %v24
  %v29 = vadd.s32 %v23, 3
  %v30 = vadd.s32 %v24, 3
  %vm31 = vcmp.lt.s32.totalorder %v26, %v29
  %vm32 = vcmp.lt.s32.totalorder %v26, %v30
  %vm33 = vmand %vm27, %vm31
  %vm34 = vmand %vm28, %vm32
  %v35 = vsel %vm33, 1, 0
  %v36 = vsel %vm34, 1, 0
  %v37 = vcvt.s32.f32 %v35
  %v38 = vcvt.s32.f32 %v36
  %v39 = vpack.c.bf16 %v38, %v37
  %v40 = vpack.c.bf16 %v18, %v18
  %v41 = vunpack.c.l.bf16 %v40
  %v42 = vsub.f32 %v18, %v41
  %v43 = vpack.c.bf16 %v42, %v42
  %vm44 = vcmask 130048
  %v46 = vsel %vm44, %v43, 0
  %48 = vmatprep.subr.bf16.mxu0 0
  %49 = vmatpush1.bf16.msra.mxu0 0
  %50 = vmatprep.subr.bf16.mxu0 0
  %51 = vmatpush1.bf16.msra.mxu0 0
  %52 = vmatprep.subr.bf16.mxu0 0
  %53 = vmatpush1.bf16.msra.mxu0 0
  %54 = vmatprep.subr.bf16.mxu0 0
  %55 = vmatpush1.bf16.msra.mxu0 0
  %56 = vmatprep.subr.bf16.mxu0 0
  %57 = vmatpush1.bf16.msra.mxu0 0
  %58 = vmatprep.subr.bf16.mxu0 0
  %59 = vmatpush1.bf16.msra.mxu0 0
  %60 = vmatprep.subr.bf16.mxu0 0
  %61 = vmatpush1.bf16.msra.mxu0 0
  %62 = vmatprep.subr.bf16.mxu0 0
  %63 = vmatpush1.bf16.msra.mxu0 %v39
  %64 = vmatprep.subr.bf16.mxu0 0
  %65 = vmatpush2.bf16.msra.mxu0 0
  %66 = vmatprep.subr.bf16.mxu0 0
  %67 = vmatpush2.bf16.msra.mxu0 0
  %68 = vmatprep.subr.bf16.mxu0 0
  %69 = vmatpush2.bf16.msra.mxu0 0
  %70 = vmatprep.subr.bf16.mxu0 0
  %71 = vmatpush2.bf16.msra.mxu0 0
  %72 = vmatprep.subr.bf16.mxu0 0
  %73 = vmatpush2.bf16.msra.mxu0 0
  %74 = vmatprep.subr.bf16.mxu0 0
  %75 = vmatpush2.bf16.msra.mxu0 0
  %76 = vmatprep.subr.bf16.mxu0 0
  %77 = vmatpush2.bf16.msra.mxu0 0
  %78 = vmatprep.subr.bf16.mxu0 0
  %79 = vmatpush2.bf16.msra.mxu0 0
  %80 = vmatprep.mubr.bf16.mxu0 0
  %81 = vmatmul.mubr.bf16.gmra.mxu0 %v46
  %v82 = vpop.f32.mrf.mxu0
  %v83 = vadd.f32 0.0, %v82
  %v84 = vpop.f32.mrf.mxu0
  %v85 = vpop.f32.mrf.mxu0
  %v86 = vpop.f32.mrf.mxu0
  %87 = vdwg.mxu0
  %v89 = vsel %vm44, %v40, 0
  %91 = vmatprep.subr.bf16.mxu0 0
  %92 = vmatpush1.bf16.msra.mxu0 0
  %93 = vmatprep.subr.bf16.mxu0 0
  %94 = vmatpush1.bf16.msra.mxu0 0
  %95 = vmatprep.subr.bf16.mxu0 0
  %96 = vmatpush1.bf16.msra.mxu0 0
  %97 = vmatprep.subr.bf16.mxu0 0
  %98 = vmatpush1.bf16.msra.mxu0 0
  %99 = vmatprep.subr.bf16.mxu0 0
  %100 = vmatpush1.bf16.msra.mxu0 0
  %101 = vmatprep.subr.bf16.mxu0 0
  %102 = vmatpush1.bf16.msra.mxu0 0
  %103 = vmatprep.subr.bf16.mxu0 0
  %104 = vmatpush1.bf16.msra.mxu0 0
  %105 = vmatprep.subr.bf16.mxu0 0
  %106 = vmatpush1.bf16.msra.mxu0 %v39
  %107 = vmatprep.subr.bf16.mxu0 0
  %108 = vmatpush2.bf16.msra.mxu0 0
  %109 = vmatprep.subr.bf16.mxu0 0
  %110 = vmatpush2.bf16.msra.mxu0 0
  %111 = vmatprep.subr.bf16.mxu0 0
  %112 = vmatpush2.bf16.msra.mxu0 0
  %113 = vmatprep.subr.bf16.mxu0 0
  %114 = vmatpush2.bf16.msra.mxu0 0
  %115 = vmatprep.subr.bf16.mxu0 0
  %116 = vmatpush2.bf16.msra.mxu0 0
  %117 = vmatprep.subr.bf16.mxu0 0
  %118 = vmatpush2.bf16.msra.mxu0 0
  %119 = vmatprep.subr.bf16.mxu0 0
  %120 = vmatpush2.bf16.msra.mxu0 0
  %121 = vmatprep.subr.bf16.mxu0 0
  %122 = vmatpush2.bf16.msra.mxu0 0
  %123 = vmatprep.mubr.bf16.mxu0 0
  %124 = vmatmul.mubr.bf16.gmra.mxu0 %v89
  %v125 = vpop.f32.mrf.mxu0
  %v126 = vadd.f32 %v83, %v125
  %v127 = vpop.f32.mrf.mxu0
  %v128 = vpop.f32.mrf.mxu0
  %v129 = vpop.f32.mrf.mxu0
  %130 = vdwg.mxu0
  %v131 = vunpack.c.l.bf16 %v43
  %v132 = vsub.f32 %v42, %v131
  %v133 = vpack.c.bf16 %v132, %v132
  %v135 = vsel %vm44, %v133, 0
  %137 = vmatprep.subr.bf16.mxu0 0
  %138 = vmatpush1.bf16.msra.mxu0 0
  %139 = vmatprep.subr.bf16.mxu0 0
  %140 = vmatpush1.bf16.msra.mxu0 0
  %141 = vmatprep.subr.bf16.mxu0 0
  %142 = vmatpush1.bf16.msra.mxu0 0
  %143 = vmatprep.subr.bf16.mxu0 0
  %144 = vmatpush1.bf16.msra.mxu0 0
  %145 = vmatprep.subr.bf16.mxu0 0
  %146 = vmatpush1.bf16.msra.mxu0 0
  %147 = vmatprep.subr.bf16.mxu0 0
  %148 = vmatpush1.bf16.msra.mxu0 0
  %149 = vmatprep.subr.bf16.mxu0 0
  %150 = vmatpush1.bf16.msra.mxu0 0
  %151 = vmatprep.subr.bf16.mxu0 0
  %152 = vmatpush1.bf16.msra.mxu0 %v39
  %153 = vmatprep.subr.bf16.mxu0 0
  %154 = vmatpush2.bf16.msra.mxu0 0
  %155 = vmatprep.subr.bf16.mxu0 0
  %156 = vmatpush2.bf16.msra.mxu0 0
  %157 = vmatprep.subr.bf16.mxu0 0
  %158 = vmatpush2.bf16.msra.mxu0 0
  %159 = vmatprep.subr.bf16.mxu0 0
  %160 = vmatpush2.bf16.msra.mxu0 0
  %161 = vmatprep.subr.bf16.mxu0 0
  %162 = vmatpush2.bf16.msra.mxu0 0
  %163 = vmatprep.subr.bf16.mxu0 0
  %164 = vmatpush2.bf16.msra.mxu0 0
  %165 = vmatprep.subr.bf16.mxu0 0
  %166 = vmatpush2.bf16.msra.mxu0 0
  %167 = vmatprep.subr.bf16.mxu0 0
  %168 = vmatpush2.bf16.msra.mxu0 0
  %169 = vmatprep.mubr.bf16.mxu0 0
  %170 = vmatmul.mubr.bf16.gmra.mxu0 %v135
  %v171 = vpop.f32.mrf.mxu0
  %v172 = vadd.f32 0.0, %v171
  %v173 = vpop.f32.mrf.mxu0
  %v174 = vpop.f32.mrf.mxu0
  %v175 = vpop.f32.mrf.mxu0
  %176 = vdwg.mxu0
  %v177 = vadd.f32 %v126, %v172
  %v178 = vsub.f32 %v177, %v19
  %vm179 = vcmp.lt.s32.totalorder %v26, 0
  %v180 = vsub.s32 0, %v26
  %v181 = vsel %vm179, %v180, %v26
  %v182 = vmul.u32.u64.compose %v181, 2863311531
  %v183 = vextract.low.u32 %v182
  %v184 = vextract.high.u32 %v182
  %v185 = vshrl.u32 %v184, 1
  %v186 = vmul.u32 %v185, 3
  %v187 = vsub.s32 %v181, %v186
  %v188 = vsub.s32 0, %v187
  %v189 = vsel %vm179, %v188, %v187
  %vm190 = vcmp.ne.s32.totalorder %v189, 0
  %vm191 = vcmp.lt.s32.totalorder %v189, 0
  %vm192 = vmand %vm191, %vm190
  %v193 = vadd.s32 %v189, 3
  %v194 = vsel %vm192, %v193, %v189
  %vm195 = vcmp.eq.s32.totalorder %v194, 0
  %v196 = vsel %vm195, -0.4, 0.0
  %vm197 = vcmp.eq.s32.totalorder %v194, 1
  %v198 = vsel %vm197, 0.0, %v196
  %vm199 = vcmp.eq.s32.totalorder %v194, 2
  %v200 = vsel %vm199, 0.4, %v198
  %v201 = vand.u32 2147483647, %v178
  %v202 = vmul.f32 %v201, 0.5
  %v203 = vmul.f32 %v200, %v178
  %v204 = vadd.f32 %v202, %v203
  %v205 = vld [vmem:[%s2] sm:$0x1]
  %vm206 = vcmask 386048
  %v207 = vsel %vm206, %v204, 0.0
  %v208 = vrot.slane %v207, 4
  %v209 = vadd.f32 %v207, %v208
  %v210 = vrot.slane %v209, 2
  %v211 = vadd.f32 %v209, %v210
  %v212 = vrot.slane %v211, 1
  %v213 = vadd.f32 %v211, %v212
  %v214 = vadd.f32 %v205, %v213
  %vm215 = vcmask 385024
  %216 = vst.msk [vmem:[%s2] sm:$0x1] %vm215, %v214
  // Predicated region
  $region14: #{_lambda_.1} parent=0 // pred_check
    _
  $region15: #{_lambda_.1} parent=0 // pred_check_branch
    %218 = sbr.rel (0) target = $region17
  $region16: #{_lambda_.1} parent=0 // pred_region
    _
  $region17: #{_lambda_.1} parent=0 // pred_fallthru
    _
  // Predicated region
  $region18: #{_lambda_.1} parent=0 // pred_check
    _
  $region19: #{_lambda_.1} parent=0 // pred_check_branch
    %220 = sbr.rel (0) target = $region21
  $region20: #{_lambda_.1} parent=0 // pred_region
    _
  $region21: #{_lambda_.1} parent=0 // pred_fallthru
    _

</llo_original>
